<compile_context>
chip_gen: v7x
topology: tpu7x:2x2x1
jax: 0.10.0
libtpu: 0.0.40
codegen_flags: <defaults>
</compile_context>

<pallas_src>
import functools
import math

import jax
import jax.numpy as jnp
from jax.experimental import pallas as pl
from jax.experimental.pallas import tpu as pltpu

EPS = 1e-5

_MAX_TILE_ROWS = 4096  # tile budget usually binds first; this is just a sanity cap


def _round_up(a, b):
    return (a + b - 1) // b * b


@functools.lru_cache(maxsize=None)
def _vmem_config():
    """(vmem_limit_bytes, tile_budget_bytes), derived from the chip's VMEM."""
    cap = 0
    try:
        info = pltpu.get_tpu_info()
        cap = int(getattr(info, "vmem_capacity_bytes", 0) or 0)
    except Exception:
        cap = 0
    if cap <= 0:
        # Conservative fallback: assume the smallest per-core VMEM (v7x, 64 MiB).
        cap = 64 << 20
    # Leave headroom for Mosaic internal scratch, semaphores, resident params.
    limit = max(40 << 20, min(cap - (12 << 20), 100 << 20))
    budget = int(limit * 0.7)
    return limit, budget


@functools.lru_cache(maxsize=None)
def _min_grid_steps():
    """Minimum grid steps: 8 on 2-TensorCore chips, 2 on single-core parts."""
    try:
        kind = jax.devices()[0].device_kind.lower()
    except Exception:
        return 8
    if ("lite" in kind) or ("v5e" in kind) or ("v6e" in kind):
        return 2  # single TensorCore: no megacore split needed, grow tiles
    return 8      # v7x/v5p/v4-style megacore: keep both cores fed


def _pick_tile_rows(n_rows, d_lanes, itemsize, sublane, budget, min_steps,
                    masked, requested=None):
    # Live bytes per element per tile: double-buffered input + output blocks
    # (4 * itemsize) plus ~3 simultaneously-live f32 temporaries in the body
    # (and a little extra on the masked small-D path).
    per_elem = 4 * itemsize + (16 if masked else 12)
    tr_budget = budget // max(1, d_lanes * per_elem)
    tr_budget = max(sublane, (tr_budget // sublane) * sublane)

    if requested is not None:
        # Honor the caller's request but never exceed the VMEM budget.
        tr = max(sublane, _round_up(requested, sublane))
        return min(tr, tr_budget)

    tr = min(tr_budget, _MAX_TILE_ROWS, _round_up(n_rows, sublane))
    # Keep enough grid steps for megacore sharding when there are enough rows.
    if min_steps > 1 and n_rows >= min_steps * sublane:
        tr = min(tr, _round_up(-(-n_rows // min_steps), sublane))
    return max(sublane, (tr // sublane) * sublane)


def _layernorm_kernel(*refs, d_valid, d_lanes, has_bias):
    if has_bias:
        x_ref, w_ref, b_ref, o_ref = refs
    else:
        x_ref, w_ref, o_ref = refs
        b_ref = None

    x = x_ref[...].astype(jnp.float32)

    masked = d_lanes != d_valid
    if masked:
        # Single-row lane mask; broadcast inside jnp.where (small-D path only).
        lane = jax.lax.broadcasted_iota(jnp.int32, (1, d_lanes), 1)
        valid = lane < d_valid
        x = jnp.where(valid, x, 0.0)

    inv_d = 1.0 / float(d_valid)
    mean = jnp.sum(x, axis=-1, keepdims=True) * inv_d
    xc = x - mean
    if masked:
        xc = jnp.where(valid, xc, 0.0)  # padded lanes must not hit the variance
    var = jnp.sum(xc * xc, axis=-1, keepdims=True) * inv_d
    inv = jax.lax.rsqrt(var + EPS)

    y = xc * inv * w_ref[...].astype(jnp.float32)
    if has_bias:
        y = y + b_ref[...].astype(jnp.float32)
    o_ref[...] = y.astype(o_ref.dtype)


@functools.partial(jax.jit, static_argnames=("block_rows",))
def layer_norm(x, weight, bias=None, *, block_rows=None):
    """LayerNorm over the last axis of x. x: (..., D); weight/bias: (D,)."""
    orig_shape = x.shape
    D = orig_shape[-1]
    R = math.prod(orig_shape[:-1])
    x2 = x.reshape(R, D)
    has_bias = bias is not None

    # Lane handling: only pad the hidden dim for very small D (< 128); otherwise
    # the block's last dim is the full array dim and no padding/slicing happens.
    pad_lanes = D < 128
    Dp = _round_up(D, 128) if pad_lanes else D

    itemsize = jnp.dtype(x.dtype).itemsize
    sublane = {4: 8, 2: 16, 1: 32}.get(itemsize, 8)

    vmem_limit, tile_budget = _vmem_config()
    min_steps = _min_grid_steps()

    tr = _pick_tile_rows(R, Dp, itemsize, sublane, tile_budget, min_steps,
                         masked=pad_lanes, requested=block_rows)

    if pad_lanes:
        x2 = jnp.pad(x2, ((0, 0), (0, Dp - D)))

    w2 = weight.reshape(1, D)
    if pad_lanes:
        w2 = jnp.pad(w2, ((0, 0), (0, Dp - D)))

    args = [x2, w2]
    in_specs = [
        pl.BlockSpec((tr, Dp), lambda i: (i, 0)),   # x row tile (ragged last block OK)
        pl.BlockSpec((1, Dp), lambda i: (0, 0)),    # weight, resident
    ]
    if has_bias:
        b2 = bias.reshape(1, D)
        if pad_lanes:
            b2 = jnp.pad(b2, ((0, 0), (0, Dp - D)))
        args.append(b2)
        in_specs.append(pl.BlockSpec((1, Dp), lambda i: (0, 0)))  # bias, resident

    kernel = functools.partial(
        _layernorm_kernel, d_valid=D, d_lanes=Dp, has_bias=has_bias
    )

    out = pl.pallas_call(
        kernel,
        out_shape=jax.ShapeDtypeStruct((R, Dp), x.dtype),
        grid_spec=pltpu.PrefetchScalarGridSpec(
            num_scalar_prefetch=0,
            grid=(pl.cdiv(R, tr),),          # no row padding; ragged tail handled
            in_specs=in_specs,
            out_specs=pl.BlockSpec((tr, Dp), lambda i: (i, 0)),
        ),
        compiler_params=pltpu.CompilerParams(
            dimension_semantics=("parallel",),
            vmem_limit_bytes=vmem_limit,
        ),
    )(*args)

    if pad_lanes:
        out = out[:, :D]
    return out.reshape(orig_shape)


def _reference_layer_norm(x, weight, bias):
    xf = x.astype(jnp.float32)
    mean = jnp.mean(xf, axis=-1, keepdims=True)
    var = jnp.mean((xf - mean) ** 2, axis=-1, keepdims=True)
    y = (xf - mean) / jnp.sqrt(var + EPS)
    y = y * weight + (bias if bias is not None else 0.0)
    return y.astype(x.dtype)


if __name__ == "__main__":
    key = jax.random.PRNGKey(0)

    # Shapes implied by the module's typical use: (batch, seq, hidden).
    batch, seq, hidden = 2, 8, 32
    x = jax.random.normal(key, (batch, seq, hidden), dtype=jnp.float32)

    # Deterministic parameter init (matches nn.Parameter(torch.ones/zeros(ndim))).
    weight = jnp.ones((hidden,), dtype=jnp.float32)
    bias = jnp.zeros((hidden,), dtype=jnp.float32)   # bias=True case

    out = jax.block_until_ready(layer_norm(x, weight, bias))
    ref = _reference_layer_norm(x, weight, bias)
    assert out.shape == x.shape and out.dtype == x.dtype
    assert jnp.allclose(out, ref, atol=1e-5, rtol=1e-5)

    # bias=None path (LayerNorm(ndim, bias=False)) — bias-free kernel variant.
    out_nb = jax.block_until_ready(layer_norm(x, weight, None))
    ref_nb = _reference_layer_norm(x, weight, None)
    assert jnp.allclose(out_nb, ref_nb, atol=1e-5, rtol=1e-5)

    # Ragged row count, lane-aligned D (no padding anywhere; ragged last block).
    x3 = jax.random.normal(key, (3, 5, 128), dtype=jnp.float32)
    w3 = jnp.ones((128,), dtype=jnp.float32)
    b3 = jnp.zeros((128,), dtype=jnp.float32)
    out3 = jax.block_until_ready(layer_norm(x3, w3, b3))
    assert jnp.allclose(out3, _reference_layer_norm(x3, w3, b3), atol=1e-5, rtol=1e-5)

    # D >= 128 but not a multiple of 128: full-D block, no host padding/slicing.
    x4 = jax.random.normal(key, (4, 7, 160), dtype=jnp.float32)
    w4 = jnp.ones((160,), dtype=jnp.float32)
    b4 = jnp.zeros((160,), dtype=jnp.float32)
    out4 = jax.block_until_ready(layer_norm(x4, w4, b4))
    assert jnp.allclose(out4, _reference_layer_norm(x4, w4, b4), atol=1e-5, rtol=1e-5)

    print("KERNEL_OK")
</pallas_src>

<mosaic_0001>
module attributes {stable_mosaic.version = 11 : i64} {
  func.func @_layernorm_kernel(%arg0: i32, %arg1: memref<16x128xf32, #tpu.memory_space<vmem>>, %arg2: memref<1x128xf32, #tpu.memory_space<vmem>>, %arg3: memref<1x128xf32, #tpu.memory_space<vmem>>, %arg4: memref<16x128xf32, #tpu.memory_space<vmem>>) attributes {dimension_semantics = [#tpu.dimension_semantics<parallel>], iteration_bounds = array<i64: 1>, scalar_prefetch = 0 : i64, scratch_operands = 0 : i64, tpu.core_type = #tpu.core_type<tc>, window_params = [{transform_indices = @transform_0, window_bounds = array<i64: 16, 128>}, {pipeline_mode = #tpu.pipeline_mode<synchronous>, transform_indices = @transform_1, window_bounds = array<i64: 1, 128>}, {pipeline_mode = #tpu.pipeline_mode<synchronous>, transform_indices = @transform_2, window_bounds = array<i64: 1, 128>}, {transform_indices = @transform_3, window_bounds = array<i64: 16, 128>}]} {
    %c0 = arith.constant 0 : index
    %c0_0 = arith.constant 0 : index
    %0 = vector.load %arg1[%c0, %c0_0] : memref<16x128xf32, #tpu.memory_space<vmem>>, vector<16x128xf32>
    %1 = tpu.iota {dimensions = array<i32: 1>} : vector<1x128xi32>
    %c32_i32 = arith.constant 32 : i32
    %2 = vector.broadcast %c32_i32 : i32 to vector<1x128xi32>
    %3 = arith.cmpi slt, %1, %2 : vector<1x128xi32>
    %cst = arith.constant 0.000000e+00 : f32
    %4 = vector.shape_cast %3 : vector<1x128xi1> to vector<1x128xi1>
    %5 = vector.broadcast %4 : vector<1x128xi1> to vector<16x128xi1>
    %6 = vector.broadcast %cst : f32 to vector<16x128xf32>
    %7 = arith.select %5, %0, %6 : vector<16x128xi1>, vector<16x128xf32>
    %cst_1 = arith.constant dense<0.000000e+00> : vector<16xf32>
    %8 = vector.multi_reduction <add>, %7, %cst_1 [1] : vector<16x128xf32> to vector<16xf32>
    %9 = vector.shape_cast %8 : vector<16xf32> to vector<16x1xf32>
    %cst_2 = arith.constant 3.125000e-02 : f32
    %10 = vector.broadcast %cst_2 : f32 to vector<16x1xf32>
    %11 = arith.mulf %9, %10 : vector<16x1xf32>
    %12 = vector.broadcast %11 : vector<16x1xf32> to vector<16x128xf32>
    %13 = arith.subf %7, %12 : vector<16x128xf32>
    %cst_3 = arith.constant 0.000000e+00 : f32
    %14 = vector.shape_cast %3 : vector<1x128xi1> to vector<1x128xi1>
    %15 = vector.broadcast %14 : vector<1x128xi1> to vector<16x128xi1>
    %16 = vector.broadcast %cst_3 : f32 to vector<16x128xf32>
    %17 = arith.select %15, %13, %16 : vector<16x128xi1>, vector<16x128xf32>
    %18 = arith.mulf %17, %17 : vector<16x128xf32>
    %cst_4 = arith.constant dense<0.000000e+00> : vector<16xf32>
    %19 = vector.multi_reduction <add>, %18, %cst_4 [1] : vector<16x128xf32> to vector<16xf32>
    %20 = vector.shape_cast %19 : vector<16xf32> to vector<16x1xf32>
    %cst_5 = arith.constant 3.125000e-02 : f32
    %21 = vector.broadcast %cst_5 : f32 to vector<16x1xf32>
    %22 = arith.mulf %20, %21 : vector<16x1xf32>
    %cst_6 = arith.constant 9.99999974E-6 : f32
    %23 = vector.broadcast %cst_6 : f32 to vector<16x1xf32>
    %24 = arith.addf %22, %23 : vector<16x1xf32>
    %25 = math.rsqrt %24 : vector<16x1xf32>
    %26 = vector.broadcast %25 : vector<16x1xf32> to vector<16x128xf32>
    %27 = arith.mulf %17, %26 : vector<16x128xf32>
    %c0_7 = arith.constant 0 : index
    %c0_8 = arith.constant 0 : index
    %28 = vector.load %arg2[%c0_7, %c0_8] : memref<1x128xf32, #tpu.memory_space<vmem>>, vector<1x128xf32>
    %29 = vector.broadcast %28 : vector<1x128xf32> to vector<16x128xf32>
    %30 = arith.mulf %27, %29 : vector<16x128xf32>
    %c0_9 = arith.constant 0 : index
    %c0_10 = arith.constant 0 : index
    %31 = vector.load %arg3[%c0_9, %c0_10] : memref<1x128xf32, #tpu.memory_space<vmem>>, vector<1x128xf32>
    %32 = vector.broadcast %31 : vector<1x128xf32> to vector<16x128xf32>
    %33 = arith.addf %30, %32 : vector<16x128xf32>
    %c0_11 = arith.constant 0 : index
    %c0_12 = arith.constant 0 : index
    %34 = vector.load %arg4[%c0_11, %c0_12] : memref<16x128xf32, #tpu.memory_space<vmem>>, vector<16x128xf32>
    tpu.vector_store %arg4[%c0_11, %c0_12], %33 {strides = array<i32>} : memref<16x128xf32, #tpu.memory_space<vmem>>, vector<16x128xf32>,
    return
  }
  func.func @transform_0(%arg0: i32) -> (i32, i32) {
    %c0_i32 = arith.constant 0 : i32
    %c0_i32_0 = arith.constant 0 : i32
    return %arg0, %c0_i32 : i32, i32
  }
  func.func @transform_1(%arg0: i32) -> (i32, i32) {
    %c0_i32 = arith.constant 0 : i32
    %c0_i32_0 = arith.constant 0 : i32
    %c0_i32_1 = arith.constant 0 : i32
    return %c0_i32, %c0_i32_0 : i32, i32
  }
  func.func @transform_2(%arg0: i32) -> (i32, i32) {
    %c0_i32 = arith.constant 0 : i32
    %c0_i32_0 = arith.constant 0 : i32
    %c0_i32_1 = arith.constant 0 : i32
    return %c0_i32, %c0_i32_0 : i32, i32
  }
  func.func @transform_3(%arg0: i32) -> (i32, i32) {
    %c0_i32 = arith.constant 0 : i32
    %c0_i32_0 = arith.constant 0 : i32
    return %arg0, %c0_i32 : i32, i32
  }
}

</mosaic_0001>

<llo_original>
// kernel: layer_norm.1
$region0: #{layer_norm.1}
  #allocation0 [shape = 'u32[]', space=smem, size = 0x4, offset = 0x4, fixed_abs, tag = 'smem constant byte address 0x4 - core index']
  #allocation1 [shape = 'u32[144,128]{1,0:T(1,128)}', space=vmem, size = 0x12000, scoped, tag = 'internal scratch']
  %s0 = inlined_call_operand.vmem [shape: f32[16,128], index: 0, kind: input, shape index: {}]
  %s1 = inlined_call_operand.vmem [shape: f32[1,128], index: 1, kind: input, shape index: {}]
  %s2 = inlined_call_operand.vmem [shape: f32[1,128], index: 2, kind: input, shape index: {}]
  %s3 = inlined_call_operand.vmem [shape: f32[16,128], index: 3, kind: output, shape index: {}]
  %s4 = sld [smem:[#allocation0]]
  $region22: #{layer_norm.1} parent=0
    _
  %s6 = ssub.s32 1, %s4
  %s7 = scalar_select 0, %s6, %s4
  // Predicated region
  $region2: #{layer_norm.1} parent=0 // pred_check
    _
  $region3: #{layer_norm.1} parent=0 // pred_check_branch
    %9 = sbr.rel (0) target = $region5
  $region4: #{layer_norm.1} parent=0 // pred_region
    _
  $region5: #{layer_norm.1} parent=0 // pred_fallthru
    _
  // Predicated region
  $region6: #{layer_norm.1} parent=0 // pred_check
    _
  $region7: #{layer_norm.1} parent=0 // pred_check_branch
    %11 = sbr.rel (0) target = $region9
  $region8: #{layer_norm.1} parent=0 // pred_region
    _
  $region9: #{layer_norm.1} parent=0 // pred_fallthru
    _
  // Predicated region
  $region10: #{layer_norm.1} parent=0 // pred_check
    _
  $region11: #{layer_norm.1} parent=0 // pred_check_branch
    %13 = sbr.rel (0) target = $region13
  $region12: #{layer_norm.1} parent=0 // pred_region
    _
  $region13: #{layer_norm.1} parent=0 // pred_fallthru
    _
  %v14 = vld [vmem:[%s0] sm:$0xff]
  %v15 = vld [vmem:[%s0 + $0x8] sm:$0xff]
  %v16 = vlaneseq
  %v17 = vand.u32 %v16, 127
  %vm18 = vcmp.lt.s32.totalorder %v17, 32
  %v19 = vsel %vm18, 1, 0
  %vm20 = vcmp.eq.s32.totalorder %v19, 1
  %v21 = vsel %vm20, %v14, 0.0
  %v22 = vsel %vm20, %v15, 0.0
  %23 = vadd.xlane.f32.xlu0 %v21
  %v24 = vpop.xlane.xlu0 %23
  %25 = vadd.xlane.f32.xlu0 %v22
  %v26 = vpop.xlane.xlu0 %25
  %v27 = vmul.f32 %v24, 0.03125
  %v28 = vmul.f32 %v26, 0.03125
  %v29 = vsub.f32 %v21, %v27
  %v30 = vsub.f32 %v22, %v28
  %v31 = vsel %vm20, %v29, 0.0
  %v32 = vsel %vm20, %v30, 0.0
  %v33 = vmul.f32 %v31, %v31
  %v34 = vmul.f32 %v32, %v32
  %35 = vadd.xlane.f32.xlu0 %v33
  %v36 = vpop.xlane.xlu0 %35
  %37 = vadd.xlane.f32.xlu0 %v34
  %v38 = vpop.xlane.xlu0 %37
  %v39 = vmul.f32 %v36, 0.03125
  %v40 = vmul.f32 %v38, 0.03125
  %v41 = vadd.f32 %v39, 1e-05
  %v42 = vadd.f32 %v40, 1e-05
  %v43 = vrsqrt.pop %v41
  %v44 = vrsqrt.pop %v42
  %v45 = vmul.f32 %v31, %v43
  %v46 = vmul.f32 %v32, %v44
  %v47 = vld [vmem:[%s1] sm:$0x1]
  %v49 = vlaneseq
  %v50 = vshrl.u32 %v49, 7
  %v51 = vsub.s32 0, %v50
  %v52 = vrot.slane %v47, %v51
  %v54 = vmul.f32 %v45, %v52
  %v55 = vmul.f32 %v46, %v52
  %v56 = vld [vmem:[%s2] sm:$0x1]
  %v58 = vlaneseq
  %v59 = vshrl.u32 %v58, 7
  %v60 = vsub.s32 0, %v59
  %v61 = vrot.slane %v56, %v60
  %v63 = vadd.f32 %v54, %v61
  %v64 = vadd.f32 %v55, %v61
  %65 = vst [vmem:[%s3] sm:$0xff] %v63
  %66 = vst [vmem:[%s3 + $0x8] sm:$0xff] %v64
  // Predicated region
  $region14: #{layer_norm.1} parent=0 // pred_check
    _
  $region15: #{layer_norm.1} parent=0 // pred_check_branch
    %68 = sbr.rel (0) target = $region17
  $region16: #{layer_norm.1} parent=0 // pred_region
    _
  $region17: #{layer_norm.1} parent=0 // pred_fallthru
    _
  // Predicated region
  $region18: #{layer_norm.1} parent=0 // pred_check
    _
  $region19: #{layer_norm.1} parent=0 // pred_check_branch
    %70 = sbr.rel (0) target = $region21
  $region20: #{layer_norm.1} parent=0 // pred_region
    _
  $region21: #{layer_norm.1} parent=0 // pred_fallthru
    _

</llo_original>
